<compile_context>
chip_gen: v7x
topology: tpu7x:2x2x1
jax: 0.10.0
libtpu: 0.0.40
codegen_flags: <defaults>
</compile_context>

<pallas_src>
import jax
import jax.numpy as jnp
from jax.experimental import pallas as pl
from jax.experimental.pallas import tpu as pltpu

_NEG_BIG = -1e30  # bias for padded logit columns: exp underflows to 0 -> prob exactly 0
                  # (representable in f32 and bf16; do not use fp16 outputs)


def _round_up(x, m):
    return ((x + m - 1) // m) * m


def _disc_kernel(x_ref, w1_ref, b1_ref, w2_ref, b2_ref,
                 rep_ref, logits_ref, probs_ref):
    """One batch tile: Linear -> LeakyReLU(0.2) -> Linear -> Softmax (eval-mode dropout)."""
    # Cast the x tile to the MXU operand dtype inside the kernel (VPU op hidden under the DMA)
    # instead of materializing a casted copy of x in HBM in the wrapper.
    x = x_ref[...].astype(w1_ref.dtype)

    # ---- hidden layer: x @ W1 + b1, LeakyReLU(0.2); f32 accumulation / f32 VPU math ----
    h = jnp.dot(x, w1_ref[...], preferred_element_type=jnp.float32)
    h = h + b1_ref[...]                               # bias kept in f32
    h = jnp.maximum(h, 0.2 * h)                       # LeakyReLU(0.2): mul+max (no select)
    rep_ref[...] = h.astype(rep_ref.dtype)

    # ---- logit head: h @ W2 + b2 (C padded to a lane-dense multiple of 128) ----
    logits = jnp.dot(h.astype(w2_ref.dtype), w2_ref[...],
                     preferred_element_type=jnp.float32)
    logits = logits + b2_ref[...]
    logits_ref[...] = logits.astype(logits_ref.dtype)

    # ---- numerically stable softmax; padded columns carry -1e30 bias -> exactly 0 prob ----
    m = jnp.max(logits, axis=-1, keepdims=True)
    e = jnp.exp(logits - m)
    denom = jnp.sum(e, axis=-1, keepdims=True)
    inv = pl.reciprocal(denom, approx=True)           # EUP slot — essentially free
    probs_ref[...] = (e * inv).astype(probs_ref.dtype)


def _choose_batch_tiling(B, block_b_max):
    """Pad-minimizing tiling: pick tile count first, then tile size; prefer an even grid >= 2
    (so both v7x TensorCores get balanced work; harmless on single-TC v5e/v6e)."""
    n_tiles = -(-B // block_b_max)                    # cdiv
    if B >= 32:                                       # don't split truly tiny batches
        if n_tiles == 1:
            n_tiles = 2
        elif n_tiles % 2:
            n_tiles += 1
    block_b = _round_up(-(-B // n_tiles), 16)         # 16-row align for bf16 sublane packing
    return n_tiles * block_b, block_b


def discriminator_forward(x, w1, b1, w2, b2, *,
                          block_b_max=512,
                          compute_dtype=jnp.bfloat16,
                          out_dtype=jnp.bfloat16,
                          vmem_limit_bytes=None):
    """GAN-BERT discriminator forward (eval-mode dropout == identity).

    x:  (B, D_in) f32 ; w1: (D_in, H), b1: (1, H) ; w2: (H, C), b2: (1, C), C = num_labels+1.
    Weights are stored transposed vs PyTorch (in_features, out_features).
    Returns (last_rep, logits, probs) with shapes (B, H), (B, C), (B, C) in `out_dtype`
    (bf16 default: halves the dominant writeback stream; pass jnp.float32 for exact-width
    outputs). For repeated jitted calls, pre-cast w1/w2 to `compute_dtype` once and pass the
    cached copies — the in-wrapper astype is then a no-op.
    """
    B, D_in = x.shape
    H = w1.shape[1]
    C = w2.shape[1]

    # Lane-dense logit head: pad C to a multiple of 128 (zero weights, huge negative bias).
    C_pad = _round_up(C, 128)
    if C_pad != C:
        w2 = jnp.pad(w2, ((0, 0), (0, C_pad - C)))
        b2 = jnp.pad(b2, ((0, 0), (0, C_pad - C)), constant_values=_NEG_BIG)

    # Batch tiling (pad-minimizing, even grid for v7x megacore).
    B_pad, block_b = _choose_batch_tiling(B, block_b_max)
    if B_pad != B:
        x = jnp.pad(x, ((0, B_pad - B), (0, 0)))

    # MXU operand dtype for weights; biases stay f32. (No wrapper cast of x — done in-kernel.)
    w1_c = w1.astype(compute_dtype)
    w2_c = w2.astype(compute_dtype)
    b1_f = b1.astype(jnp.float32)
    b2_f = b2.astype(jnp.float32)

    grid = (B_pad // block_b,)

    def _const(shape):
        # Grid-invariant params: constant index_map -> DMA'd once, reused every step.
        return pl.BlockSpec(shape, lambda i: (0, 0))

    in_specs = [
        pl.BlockSpec((block_b, D_in), lambda i: (i, 0)),   # x tile streamed over batch
        _const((D_in, H)),                                 # W1
        _const((1, H)),                                    # b1
        _const((H, C_pad)),                                # W2 (lane-padded)
        _const((1, C_pad)),                                # b2 (lane-padded)
    ]
    out_specs = [
        pl.BlockSpec((block_b, H), lambda i: (i, 0)),      # last_rep
        pl.BlockSpec((block_b, C_pad), lambda i: (i, 0)),  # logits (lane-dense stores)
        pl.BlockSpec((block_b, C_pad), lambda i: (i, 0)),  # probs  (lane-dense stores)
    ]
    out_shapes = (
        jax.ShapeDtypeStruct((B_pad, H), out_dtype),
        jax.ShapeDtypeStruct((B_pad, C_pad), out_dtype),
        jax.ShapeDtypeStruct((B_pad, C_pad), out_dtype),
    )

    # Advisory cost estimate for XLA's scheduler around the custom call.
    w_isz = jnp.dtype(compute_dtype).itemsize
    o_isz = jnp.dtype(out_dtype).itemsize
    cost = pl.CostEstimate(
        flops=2 * B_pad * (D_in * H + H * C_pad),
        transcendentals=B_pad * C_pad,                     # exp in the softmax
        bytes_accessed=(B_pad * D_in * x.dtype.itemsize    # x read (f32)
                        + (D_in * H + H * C_pad) * w_isz   # weights
                        + (H + C_pad) * 4                  # biases (f32)
                        + B_pad * (H + 2 * C_pad) * o_isz  # rep + logits + probs writeback
                        ),
    )

    rep, logits, probs = pl.pallas_call(
        _disc_kernel,
        out_shape=out_shapes,
        grid_spec=pltpu.PrefetchScalarGridSpec(
            num_scalar_prefetch=0,
            grid=grid,
            in_specs=in_specs,
            out_specs=out_specs,
        ),
        compiler_params=pltpu.CompilerParams(
            # batch tiles are independent -> sharded across v7x's 2 TensorCores when grid >= 2
            dimension_semantics=("parallel",),
            vmem_limit_bytes=vmem_limit_bytes,
        ),
        cost_estimate=cost,
    )(x, w1_c, b1_f, w2_c, b2_f)

    # Strip batch padding and the lane padding of the logit head.
    return rep[:B], logits[:B, :C], probs[:B, :C]


def init_discriminator_params(key, input_size, hidden_size, num_labels):
    """PyTorch-Linear-style init (uniform +-1/sqrt(fan_in)); W stored as (in, out)."""
    k1, k2, k3, k4 = jax.random.split(key, 4)
    bound1 = 1.0 / jnp.sqrt(input_size)
    bound2 = 1.0 / jnp.sqrt(hidden_size)
    w1 = jax.random.uniform(k1, (input_size, hidden_size), jnp.float32, -bound1, bound1)
    b1 = jax.random.uniform(k2, (1, hidden_size), jnp.float32, -bound1, bound1)
    w2 = jax.random.uniform(k3, (hidden_size, num_labels + 1), jnp.float32, -bound2, bound2)
    b2 = jax.random.uniform(k4, (1, num_labels + 1), jnp.float32, -bound2, bound2)
    return w1, b1, w2, b2


if __name__ == "__main__":
    # Small shapes consistent with the module:
    # Discriminator(input_size=32, hidden_sizes=[32], num_labels=2)
    B, D_IN, HID, NUM_LABELS = 16, 32, 32, 2

    key = jax.random.PRNGKey(0)
    kx, kp = jax.random.split(key)
    x = jax.random.normal(kx, (B, D_IN), dtype=jnp.float32)
    w1, b1, w2, b2 = init_discriminator_params(kp, D_IN, HID, NUM_LABELS)

    # Recommended usage: cache bf16 weight copies once outside the hot path (the wrapper's
    # astype is then a no-op on every call).
    w1_bf = w1.astype(jnp.bfloat16)
    w2_bf = w2.astype(jnp.bfloat16)

    last_rep, logits, probs = discriminator_forward(x, w1_bf, b1, w2_bf, b2)
    jax.block_until_ready((last_rep, logits, probs))

    # Plain-JAX f32 reference (eval-mode dropout == identity). Tolerances cover bf16 MXU
    # operands, bf16 outputs, and the approximate EUP reciprocal in the softmax.
    h_ref = x @ w1 + b1
    h_ref = jnp.where(h_ref > 0, h_ref, 0.2 * h_ref)
    logits_ref = h_ref @ w2 + b2
    probs_ref = jax.nn.softmax(logits_ref, axis=-1)

    assert last_rep.shape == (B, HID)
    assert logits.shape == (B, NUM_LABELS + 1)
    assert probs.shape == (B, NUM_LABELS + 1)
    assert jnp.allclose(last_rep.astype(jnp.float32), h_ref, atol=3e-2, rtol=3e-2)
    assert jnp.allclose(logits.astype(jnp.float32), logits_ref, atol=3e-2, rtol=3e-2)
    assert jnp.allclose(probs.astype(jnp.float32), probs_ref, atol=3e-2)

    print("KERNEL_OK")
</pallas_src>

<mosaic_0001>
module attributes {stable_mosaic.version = 11 : i64} {
  func.func @_disc_kernel(%arg0: i32, %arg1: memref<16x32xf32, #tpu.memory_space<vmem>>, %arg2: memref<32x32xbf16, #tpu.memory_space<vmem>>, %arg3: memref<1x32xf32, #tpu.memory_space<vmem>>, %arg4: memref<32x128xbf16, #tpu.memory_space<vmem>>, %arg5: memref<1x128xf32, #tpu.memory_space<vmem>>, %arg6: memref<16x32xbf16, #tpu.memory_space<vmem>>, %arg7: memref<16x128xbf16, #tpu.memory_space<vmem>>, %arg8: memref<16x128xbf16, #tpu.memory_space<vmem>>) attributes {dimension_semantics = [#tpu.dimension_semantics<parallel>], iteration_bounds = array<i64: 1>, scalar_prefetch = 0 : i64, scratch_operands = 0 : i64, tpu.core_type = #tpu.core_type<tc>, window_params = [{transform_indices = @transform_0, window_bounds = array<i64: 16, 32>}, {pipeline_mode = #tpu.pipeline_mode<synchronous>, transform_indices = @transform_1, window_bounds = array<i64: 32, 32>}, {pipeline_mode = #tpu.pipeline_mode<synchronous>, transform_indices = @transform_2, window_bounds = array<i64: 1, 32>}, {pipeline_mode = #tpu.pipeline_mode<synchronous>, transform_indices = @transform_3, window_bounds = array<i64: 32, 128>}, {pipeline_mode = #tpu.pipeline_mode<synchronous>, transform_indices = @transform_4, window_bounds = array<i64: 1, 128>}, {transform_indices = @transform_5, window_bounds = array<i64: 16, 32>}, {transform_indices = @transform_6, window_bounds = array<i64: 16, 128>}, {transform_indices = @transform_7, window_bounds = array<i64: 16, 128>}]} {
    %c0 = arith.constant 0 : index
    %c0_0 = arith.constant 0 : index
    %0 = vector.load %arg1[%c0, %c0_0] : memref<16x32xf32, #tpu.memory_space<vmem>>, vector<16x32xf32>
    %1 = arith.truncf %0 : vector<16x32xf32> to vector<16x32xbf16>
    %c0_1 = arith.constant 0 : index
    %c0_2 = arith.constant 0 : index
    %2 = vector.load %arg2[%c0_1, %c0_2] : memref<32x32xbf16, #tpu.memory_space<vmem>>, vector<32x32xbf16>
    %cst = arith.constant dense<0.000000e+00> : vector<16x32xf32>
    %3 = tpu.matmul %1, %2, %cst {dimension_numbers = #tpu.dot_dimension_numbers<[1], [0], [0], [1], [0, 0, 1, 1], [], []>} : vector<16x32xbf16>, vector<32x32xbf16>, vector<16x32xf32> -> vector<16x32xf32>
    %c0_3 = arith.constant 0 : index
    %c0_4 = arith.constant 0 : index
    %4 = vector.load %arg3[%c0_3, %c0_4] : memref<1x32xf32, #tpu.memory_space<vmem>>, vector<1x32xf32>
    %5 = vector.broadcast %4 : vector<1x32xf32> to vector<16x32xf32>
    %6 = arith.addf %3, %5 : vector<16x32xf32>
    %cst_5 = arith.constant 2.000000e-01 : f32
    %7 = vector.broadcast %cst_5 : f32 to vector<16x32xf32>
    %8 = arith.mulf %7, %6 : vector<16x32xf32>
    %9 = arith.maximumf %6, %8 : vector<16x32xf32>
    %10 = arith.truncf %9 : vector<16x32xf32> to vector<16x32xbf16>
    %c0_6 = arith.constant 0 : index
    %c0_7 = arith.constant 0 : index
    %11 = vector.load %arg6[%c0_6, %c0_7] : memref<16x32xbf16, #tpu.memory_space<vmem>>, vector<16x32xbf16>
    tpu.vector_store %arg6[%c0_6, %c0_7], %10 {strides = array<i32>} : memref<16x32xbf16, #tpu.memory_space<vmem>>, vector<16x32xbf16>,
    %12 = arith.truncf %9 : vector<16x32xf32> to vector<16x32xbf16>
    %c0_8 = arith.constant 0 : index
    %c0_9 = arith.constant 0 : index
    %13 = vector.load %arg4[%c0_8, %c0_9] : memref<32x128xbf16, #tpu.memory_space<vmem>>, vector<32x128xbf16>
    %cst_10 = arith.constant dense<0.000000e+00> : vector<16x128xf32>
    %14 = tpu.matmul %12, %13, %cst_10 {dimension_numbers = #tpu.dot_dimension_numbers<[1], [0], [0], [1], [0, 0, 1, 1], [], []>} : vector<16x32xbf16>, vector<32x128xbf16>, vector<16x128xf32> -> vector<16x128xf32>
    %c0_11 = arith.constant 0 : index
    %c0_12 = arith.constant 0 : index
    %15 = vector.load %arg5[%c0_11, %c0_12] : memref<1x128xf32, #tpu.memory_space<vmem>>, vector<1x128xf32>
    %16 = vector.broadcast %15 : vector<1x128xf32> to vector<16x128xf32>
    %17 = arith.addf %14, %16 : vector<16x128xf32>
    %18 = arith.truncf %17 : vector<16x128xf32> to vector<16x128xbf16>
    %c0_13 = arith.constant 0 : index
    %c0_14 = arith.constant 0 : index
    %19 = vector.load %arg7[%c0_13, %c0_14] : memref<16x128xbf16, #tpu.memory_space<vmem>>, vector<16x128xbf16>
    tpu.vector_store %arg7[%c0_13, %c0_14], %18 {strides = array<i32>} : memref<16x128xbf16, #tpu.memory_space<vmem>>, vector<16x128xbf16>,
    %cst_15 = arith.constant dense<0xFF800000> : vector<16xf32>
    %20 = vector.multi_reduction <maximumf>, %17, %cst_15 [1] : vector<16x128xf32> to vector<16xf32>
    %21 = vector.shape_cast %20 : vector<16xf32> to vector<16x1xf32>
    %22 = vector.broadcast %21 : vector<16x1xf32> to vector<16x128xf32>
    %23 = arith.subf %17, %22 : vector<16x128xf32>
    %24 = math.exp %23 : vector<16x128xf32>
    %cst_16 = arith.constant dense<0.000000e+00> : vector<16xf32>
    %25 = vector.multi_reduction <add>, %24, %cst_16 [1] : vector<16x128xf32> to vector<16xf32>
    %26 = vector.shape_cast %25 : vector<16xf32> to vector<16x1xf32>
    %27 = tpu.reciprocal %26 {approx = true} : vector<16x1xf32> -> vector<16x1xf32>
    %28 = vector.broadcast %27 : vector<16x1xf32> to vector<16x128xf32>
    %29 = arith.mulf %24, %28 : vector<16x128xf32>
    %30 = arith.truncf %29 : vector<16x128xf32> to vector<16x128xbf16>
    %c0_17 = arith.constant 0 : index
    %c0_18 = arith.constant 0 : index
    %31 = vector.load %arg8[%c0_17, %c0_18] : memref<16x128xbf16, #tpu.memory_space<vmem>>, vector<16x128xbf16>
    tpu.vector_store %arg8[%c0_17, %c0_18], %30 {strides = array<i32>} : memref<16x128xbf16, #tpu.memory_space<vmem>>, vector<16x128xbf16>,
    return
  }
  func.func @transform_0(%arg0: i32) -> (i32, i32) {
    %c0_i32 = arith.constant 0 : i32
    %c0_i32_0 = arith.constant 0 : i32
    return %arg0, %c0_i32 : i32, i32
  }
  func.func @transform_1(%arg0: i32) -> (i32, i32) {
    %c0_i32 = arith.constant 0 : i32
    %c0_i32_0 = arith.constant 0 : i32
    %c0_i32_1 = arith.constant 0 : i32
    return %c0_i32, %c0_i32_0 : i32, i32
  }
  func.func @transform_2(%arg0: i32) -> (i32, i32) {
    %c0_i32 = arith.constant 0 : i32
    %c0_i32_0 = arith.constant 0 : i32
    %c0_i32_1 = arith.constant 0 : i32
    return %c0_i32, %c0_i32_0 : i32, i32
  }
  func.func @transform_3(%arg0: i32) -> (i32, i32) {
    %c0_i32 = arith.constant 0 : i32
    %c0_i32_0 = arith.constant 0 : i32
    %c0_i32_1 = arith.constant 0 : i32
    return %c0_i32, %c0_i32_0 : i32, i32
  }
  func.func @transform_4(%arg0: i32) -> (i32, i32) {
    %c0_i32 = arith.constant 0 : i32
    %c0_i32_0 = arith.constant 0 : i32
    %c0_i32_1 = arith.constant 0 : i32
    return %c0_i32, %c0_i32_0 : i32, i32
  }
  func.func @transform_5(%arg0: i32) -> (i32, i32) {
    %c0_i32 = arith.constant 0 : i32
    %c0_i32_0 = arith.constant 0 : i32
    return %arg0, %c0_i32 : i32, i32
  }
  func.func @transform_6(%arg0: i32) -> (i32, i32) {
    %c0_i32 = arith.constant 0 : i32
    %c0_i32_0 = arith.constant 0 : i32
    return %arg0, %c0_i32 : i32, i32
  }
  func.func @transform_7(%arg0: i32) -> (i32, i32) {
    %c0_i32 = arith.constant 0 : i32
    %c0_i32_0 = arith.constant 0 : i32
    return %arg0, %c0_i32 : i32, i32
  }
}

</mosaic_0001>

<llo_original>
// kernel: tpu_custom_call.1
$region0: #{tpu_custom_call.1}
  #allocation0 [shape = 'u32[]', space=smem, size = 0x4, offset = 0x4, fixed_abs, tag = 'smem constant byte address 0x4 - core index']
  #allocation1 [shape = 'u32[144,128]{1,0:T(1,128)}', space=vmem, size = 0x12000, scoped, tag = 'internal scratch']
  %s0 = inlined_call_operand.hbm [shape: f32[16,32], index: 0, kind: input, shape index: {}]
  %s1 = inlined_call_operand.hbm [shape: bf16[32,32], index: 1, kind: input, shape index: {}]
  %s2 = inlined_call_operand.vmem [shape: f32[1,32], index: 2, kind: input, shape index: {}]
  %s3 = inlined_call_operand.hbm [shape: bf16[32,128], index: 3, kind: input, shape index: {}]
  %s4 = inlined_call_operand.vmem [shape: f32[1,128], index: 4, kind: input, shape index: {}]
  %s5 = inlined_call_operand.hbm [shape: bf16[16,32], index: 5, kind: output, shape index: {0}]
  %s6 = inlined_call_operand.hbm [shape: bf16[16,128], index: 6, kind: output, shape index: {1}]
  %s7 = inlined_call_operand.hbm [shape: bf16[16,128], index: 7, kind: output, shape index: {2}]
  %8 = xla_tuple %s5, %s6, %s7
  %s9 = sld [smem:[#allocation0]]
  $region58: #{tpu_custom_call.1} parent=0
    _
  %s11 = ssub.s32 1, %s9
  %s12 = scalar_select 0, %s11, %s9
  $region1: #{tpu_custom_call.1} parent=0
    #allocation2 [shape = 'u8[8192]{0}', space=vmem, size = 0x2000, scoped, tag = 'input window, operand 0, single buffered']
    #allocation3 [shape = 's32[1]{0}', space=sflag, size = 0x4, scoped, tag = 'scoped memory for tpu_custom_call.1']
    #allocation4 [shape = 's32[1]{0}', space=sflag, size = 0x4, scoped, tag = 'scoped memory for tpu_custom_call.1']
    #allocation5 [shape = 'u8[8192]{0}', space=vmem, size = 0x2000, scoped, tag = 'input window, operand 1, single buffered']
    #allocation6 [shape = 's32[1]{0}', space=sflag, size = 0x4, scoped, tag = 'scoped memory for tpu_custom_call.1']
    #allocation7 [shape = 'u8[8192]{0}', space=vmem, size = 0x2000, scoped, tag = 'input window, operand 3, single buffered']
    #allocation8 [shape = 'u8[4096]{0}', space=vmem, size = 0x1000, scoped, tag = 'output window, operand 0, single buffered']
    #allocation9 [shape = 'u8[4096]{0}', space=vmem, size = 0x1000, scoped, tag = 'output window, operand 1, single buffered']
    #allocation10 [shape = 's32[1]{0}', space=sflag, size = 0x4, scoped, tag = 'scoped memory for tpu_custom_call.1']
    #allocation11 [shape = 'u8[4096]{0}', space=vmem, size = 0x1000, scoped, tag = 'output window, operand 2, single buffered']
    %13 = vsyncpa [#allocation3], 0
    %14 = vsyncpa [#allocation6], 0
    %15 = vsyncpa [#allocation4], 0
    %16 = vsyncpa [#allocation10], 0
    // Predicated region
    $region2: #{tpu_custom_call.1} parent=1 // pred_check
      _
    $region3: #{tpu_custom_call.1} parent=1 // pred_check_branch
      %18 = sbr.rel (0) target = $region5
    $region4: #{tpu_custom_call.1} parent=1 // pred_region
      %s20 = ssub.s32 256, 256
      %21 = vsyncadd [#allocation3], %s20
      %s22 = sshll.u32 [#allocation2], 4
      %s23 = int_to_ptr.vmem [resolvable:$true] %s22
      %28 = dma.hbm_to_vmem [thread:$0]  %s0, 256, %s23, [#allocation3], 128, 128, 8
    $region5: #{tpu_custom_call.1} parent=1 // pred_fallthru
      _
    // Predicated region
    $region6: #{tpu_custom_call.1} parent=1 // pred_check
      _
    $region7: #{tpu_custom_call.1} parent=1 // pred_check_branch
      %30 = sbr.rel (0) target = $region9
    $region8: #{tpu_custom_call.1} parent=1 // pred_region
      %s32 = ssub.s32 256, 256
      %33 = vsyncadd [#allocation6], %s32
      %s34 = sshll.u32 [#allocation5], 4
      %s35 = int_to_ptr.vmem [resolvable:$true] %s34
      %40 = dma.hbm_to_vmem [thread:$0]  %s1, 256, %s35, [#allocation6], 64, 64, 4
    $region9: #{tpu_custom_call.1} parent=1 // pred_fallthru
      _
    // Predicated region
    $region10: #{tpu_custom_call.1} parent=1 // pred_check
      _
    $region11: #{tpu_custom_call.1} parent=1 // pred_check_branch
      %42 = sbr.rel (0) target = $region13
    $region12: #{tpu_custom_call.1} parent=1 // pred_region
      _
    $region13: #{tpu_custom_call.1} parent=1 // pred_fallthru
      _
    // Predicated region
    $region14: #{tpu_custom_call.1} parent=1 // pred_check
      _
    $region15: #{tpu_custom_call.1} parent=1 // pred_check_branch
      %44 = sbr.rel (0) target = $region17
    $region16: #{tpu_custom_call.1} parent=1 // pred_region
      %s46 = ssub.s32 256, 256
      %47 = vsyncadd [#allocation6], %s46
      %s48 = sshll.u32 [#allocation7], 4
      %s49 = int_to_ptr.vmem [resolvable:$true] %s48
      %54 = dma.hbm_to_vmem [thread:$0]  %s3, 256, %s49, [#allocation6], 64, 64, 4
    $region17: #{tpu_custom_call.1} parent=1 // pred_fallthru
      _
    // Predicated region
    $region18: #{tpu_custom_call.1} parent=1 // pred_check
      _
    $region19: #{tpu_custom_call.1} parent=1 // pred_check_branch
      %56 = sbr.rel (0) target = $region21
    $region20: #{tpu_custom_call.1} parent=1 // pred_region
      _
    $region21: #{tpu_custom_call.1} parent=1 // pred_fallthru
      _
    // Predicated region
    $region22: #{tpu_custom_call.1} parent=1 // pred_check
      _
    $region23: #{tpu_custom_call.1} parent=1 // pred_check_branch
      %58 = sbr.rel (0) target = $region25
    $region24: #{tpu_custom_call.1} parent=1 // pred_region
      %59 = dma.done [#allocation3], 256
    $region25: #{tpu_custom_call.1} parent=1 // pred_fallthru
      _
    // Predicated region
    $region26: #{tpu_custom_call.1} parent=1 // pred_check
      _
    $region27: #{tpu_custom_call.1} parent=1 // pred_check_branch
      %61 = sbr.rel (0) target = $region29
    $region28: #{tpu_custom_call.1} parent=1 // pred_region
      %62 = dma.done [#allocation6], 256
    $region29: #{tpu_custom_call.1} parent=1 // pred_fallthru
      _
    // Predicated region
    $region30: #{tpu_custom_call.1} parent=1 // pred_check
      _
    $region31: #{tpu_custom_call.1} parent=1 // pred_check_branch
      %64 = sbr.rel (0) target = $region33
    $region32: #{tpu_custom_call.1} parent=1 // pred_region
      %65 = dma.done [#allocation6], 256
    $region33: #{tpu_custom_call.1} parent=1 // pred_fallthru
      _
    %v67 = vld [vmem:[#allocation2] sm:$0xff]
    %v68 = vld [vmem:[#allocation2 + $0x8] sm:$0xff]
    %v69 = vpack.c.bf16 %v68, %v67
    %v70 = vld [vmem:[#allocation5] sm:$0xf]
    %v71 = vld [vmem:[#allocation5 + $0x4] sm:$0xf]
    %v72 = vld [vmem:[#allocation5 + $0x8] sm:$0xf]
    %v73 = vld [vmem:[#allocation5 + $0xc] sm:$0xf]
    %v74 = vld [vmem:[%s2] sm:$0x1]
    %v76 = vlaneseq
    %v77 = vshrl.u32 %v76, 7
    %v78 = vsub.s32 0, %v77
    %v79 = vrot.slane %v74, %v78
    %v85 = vunpack.c.l.b16 %v70
    %v86 = vunpack.c.l.b16 %v71
    %v87 = vunpack.c.l.b16 %v72
    %v88 = vunpack.c.l.b16 %v73
    %v89 = vpack.c.b16 %v86, %v85
    %v90 = vpack.c.b16 %v88, %v87
    %vm93 = vcmask 261120
    %v95 = vsel %vm93, %v69, 0
    %97 = vmatprep.subr.bf16.mxu0 0
    %98 = vmatpush1.bf16.msra.mxu0 %v89
    %99 = vmatprep.subr.bf16.mxu0 0
    %100 = vmatpush1.bf16.msra.mxu0 %v90
    %101 = vmatprep.subr.bf16.mxu0 0
    %102 = vmatpush1.bf16.msra.mxu0 0
    %103 = vmatprep.subr.bf16.mxu0 0
    %104 = vmatpush1.bf16.msra.mxu0 0
    %105 = vmatprep.subr.bf16.mxu0 0
    %106 = vmatpush1.bf16.msra.mxu0 0
    %107 = vmatprep.subr.bf16.mxu0 0
    %108 = vmatpush1.bf16.msra.mxu0 0
    %109 = vmatprep.subr.bf16.mxu0 0
    %110 = vmatpush1.bf16.msra.mxu0 0
    %111 = vmatprep.subr.bf16.mxu0 0
    %112 = vmatpush1.bf16.msra.mxu0 0
    %113 = vmatprep.subr.bf16.mxu0 0
    %114 = vmatpush1.bf16.msra.mxu0 0
    %115 = vmatprep.subr.bf16.mxu0 0
    %116 = vmatpush1.bf16.msra.mxu0 0
    %117 = vmatprep.subr.bf16.mxu0 0
    %118 = vmatpush1.bf16.msra.mxu0 0
    %119 = vmatprep.subr.bf16.mxu0 0
    %120 = vmatpush1.bf16.msra.mxu0 0
    %121 = vmatprep.subr.bf16.mxu0 0
    %122 = vmatpush1.bf16.msra.mxu0 0
    %123 = vmatprep.subr.bf16.mxu0 0
    %124 = vmatpush1.bf16.msra.mxu0 0
    %125 = vmatprep.subr.bf16.mxu0 0
    %126 = vmatpush1.bf16.msra.mxu0 0
    %127 = vmatprep.subr.bf16.mxu0 0
    %128 = vmatpush1.bf16.msra.mxu0 0
    %129 = vmatprep.mubr.bf16.mxu0 0
    %130 = vmatmul.mubr.bf16.gmra.mrb[0].mxu0 %v95
    %v131 = vpop.f32.mrb[0].mxu0
    %v132 = vadd.f32 %v79, %v131
    %v133 = vpop.f32.mrb[0].mxu0
    %v134 = vpop.f32.mrb[0].mxu0
    %v135 = vadd.f32 %v79, %v134
    %v136 = vpop.f32.mrb[0].mxu0
    %137 = vdwg.mxu0
    %v138 = vmul.f32 %v132, 0.2
    %v139 = vmul.f32 %v135, 0.2
    %v140 = vmax.f32 %v132, %v138
    %v141 = vmax.f32 %v135, %v139
    %v142 = vpack.c.bf16 %v141, %v140
    %v144 = vunpack.c.l.b16 %v142
    %v145 = vunpack.c.h.b16 %v142
    %v146 = vpack.c.b16 %v144, %v144
    %v147 = vpack.c.b16 %v145, %v145
    %vm150 = vcmask 257024
    %151 = vst.msk [vmem:[#allocation8] sm:$0xf] %vm150, %v146
    %152 = vst.msk [vmem:[#allocation8 + $0x4] sm:$0xf] %vm150, %v147
    %v153 = vld [vmem:[#allocation7] sm:$0xf]
    %v154 = vld [vmem:[#allocation7 + $0x4] sm:$0xf]
    %v155 = vld [vmem:[#allocation7 + $0x8] sm:$0xf]
    %v156 = vld [vmem:[#allocation7 + $0xc] sm:$0xf]
    %v157 = vld [vmem:[%s4] sm:$0x1]
    %v159 = vlaneseq
    %v160 = vshrl.u32 %v159, 7
    %v161 = vsub.s32 0, %v160
    %v162 = vrot.slane %v157, %v161
    %v168 = vunpack.c.l.b16 %v153
    %v169 = vunpack.c.l.b16 %v154
    %v170 = vunpack.c.l.b16 %v155
    %v171 = vunpack.c.l.b16 %v156
    %v172 = vpack.c.b16 %v169, %v168
    %v173 = vpack.c.b16 %v171, %v170
    %v177 = vsel %vm93, %v142, 0
    %179 = vmatprep.subr.bf16.mxu0 0
    %180 = vmatpush1.bf16.msra.mxu0 %v172
    %181 = vmatprep.subr.bf16.mxu0 0
    %182 = vmatpush1.bf16.msra.mxu0 %v173
    %183 = vmatprep.subr.bf16.mxu0 0
    %184 = vmatpush1.bf16.msra.mxu0 0
    %185 = vmatprep.subr.bf16.mxu0 0
    %186 = vmatpush1.bf16.msra.mxu0 0
    %187 = vmatprep.subr.bf16.mxu0 0
    %188 = vmatpush1.bf16.msra.mxu0 0
    %189 = vmatprep.subr.bf16.mxu0 0
    %190 = vmatpush1.bf16.msra.mxu0 0
    %191 = vmatprep.subr.bf16.mxu0 0
    %192 = vmatpush1.bf16.msra.mxu0 0
    %193 = vmatprep.subr.bf16.mxu0 0
    %194 = vmatpush1.bf16.msra.mxu0 0
    %195 = vmatprep.subr.bf16.mxu0 0
    %196 = vmatpush1.bf16.msra.mxu0 0
    %197 = vmatprep.subr.bf16.mxu0 0
    %198 = vmatpush1.bf16.msra.mxu0 0
    %199 = vmatprep.subr.bf16.mxu0 0
    %200 = vmatpush1.bf16.msra.mxu0 0
    %201 = vmatprep.subr.bf16.mxu0 0
    %202 = vmatpush1.bf16.msra.mxu0 0
    %203 = vmatprep.subr.bf16.mxu0 0
    %204 = vmatpush1.bf16.msra.mxu0 0
    %205 = vmatprep.subr.bf16.mxu0 0
    %206 = vmatpush1.bf16.msra.mxu0 0
    %207 = vmatprep.subr.bf16.mxu0 0
    %208 = vmatpush1.bf16.msra.mxu0 0
    %209 = vmatprep.subr.bf16.mxu0 0
    %210 = vmatpush1.bf16.msra.mxu0 0
    %211 = vmatprep.mubr.bf16.mxu0 0
    %212 = vmatmul.mubr.bf16.gmra.mrb[0].mxu0 %v177
    %v213 = vpop.f32.mrb[0].mxu0
    %v214 = vadd.f32 %v162, %v213
    %v215 = vpop.f32.mrb[0].mxu0
    %v216 = vpop.f32.mrb[0].mxu0
    %v217 = vadd.f32 %v162, %v216
    %v218 = vpop.f32.mrb[0].mxu0
    %219 = vdwg.mxu0
    %v220 = vpack.c.bf16 %v217, %v214
    %v222 = vunpack.c.l.b16 %v220
    %v223 = vunpack.c.h.b16 %v220
    %v224 = vpack.c.b16 %v222, %v222
    %v225 = vpack.c.b16 %v223, %v223
    %228 = vst [vmem:[#allocation9] sm:$0xf] %v224
    %229 = vst [vmem:[#allocation9 + $0x4] sm:$0xf] %v225
    %230 = vmax.xlane.f32.xlu0 %v214
    %v231 = vpop.xlane.xlu0 %230
    %232 = vmax.xlane.f32.xlu0 %v217
    %v233 = vpop.xlane.xlu0 %232
    %v234 = vsub.f32 %v214, %v231
    %v235 = vsub.f32 %v217, %v233
    %v236 = vmul.f32 %v234, 1.442695
    %v237 = vpow.pop %v236
    %v238 = vmul.f32 %v235, 1.442695
    %v239 = vpow.pop %v238
    %240 = vadd.xlane.f32.xlu0 %v237
    %v241 = vpop.xlane.xlu0 %240
    %242 = vadd.xlane.f32.xlu0 %v239
    %v243 = vpop.xlane.xlu0 %242
    %v244 = vrcp.pop %v241
    %v245 = vrcp.pop %v243
    %v246 = vmul.f32 %v237, %v244
    %v247 = vmul.f32 %v239, %v245
    %v248 = vpack.c.bf16 %v247, %v246
    %v250 = vunpack.c.l.b16 %v248
    %v251 = vunpack.c.h.b16 %v248
    %v252 = vpack.c.b16 %v250, %v250
    %v253 = vpack.c.b16 %v251, %v251
    %256 = vst [vmem:[#allocation11] sm:$0xf] %v252
    %257 = vst [vmem:[#allocation11 + $0x4] sm:$0xf] %v253
    // Predicated region
    $region34: #{tpu_custom_call.1} parent=1 // pred_check
      _
    $region35: #{tpu_custom_call.1} parent=1 // pred_check_branch
      %259 = sbr.rel (0) target = $region37
    $region36: #{tpu_custom_call.1} parent=1 // pred_region
      %s261 = ssub.s32 128, 128
      %262 = vsyncadd [#allocation4], %s261
      %s263 = sshll.u32 [#allocation8], 4
      %s264 = int_to_ptr.vmem [resolvable:$true] %s263
      %269 = dma.vmem_to_hbm [thread:$0]  %s264, 128, %s5, [#allocation4], 64, 64, 4
    $region37: #{tpu_custom_call.1} parent=1 // pred_fallthru
      _
    // Predicated region
    $region38: #{tpu_custom_call.1} parent=1 // pred_check
      _
    $region39: #{tpu_custom_call.1} parent=1 // pred_check_branch
      %271 = sbr.rel (0) target = $region41
    $region40: #{tpu_custom_call.1} parent=1 // pred_region
      %s273 = ssub.s32 128, 128
      %274 = vsyncadd [#allocation10], %s273
      %s275 = sshll.u32 [#allocation9], 4
      %s276 = int_to_ptr.vmem [resolvable:$true] %s275
      %281 = dma.vmem_to_hbm [thread:$0]  %s276, 128, %s6, [#allocation10], 64, 64, 4
    $region41: #{tpu_custom_call.1} parent=1 // pred_fallthru
      _
    // Predicated region
    $region42: #{tpu_custom_call.1} parent=1 // pred_check
      _
    $region43: #{tpu_custom_call.1} parent=1 // pred_check_branch
      %283 = sbr.rel (0) target = $region45
    $region44: #{tpu_custom_call.1} parent=1 // pred_region
      %s285 = ssub.s32 128, 128
      %286 = vsyncadd [#allocation10], %s285
      %s287 = sshll.u32 [#allocation11], 4
      %s288 = int_to_ptr.vmem [resolvable:$true] %s287
      %293 = dma.vmem_to_hbm [thread:$0]  %s288, 128, %s7, [#allocation10], 64, 64, 4
    $region45: #{tpu_custom_call.1} parent=1 // pred_fallthru
      _
    // Predicated region
    $region46: #{tpu_custom_call.1} parent=1 // pred_check
      _
    $region47: #{tpu_custom_call.1} parent=1 // pred_check_branch
      %295 = sbr.rel (0) target = $region49
    $region48: #{tpu_custom_call.1} parent=1 // pred_region
      %296 = dma.done [#allocation4], 128
    $region49: #{tpu_custom_call.1} parent=1 // pred_fallthru
      _
    // Predicated region
    $region50: #{tpu_custom_call.1} parent=1 // pred_check
      _
    $region51: #{tpu_custom_call.1} parent=1 // pred_check_branch
      %298 = sbr.rel (0) target = $region53
    $region52: #{tpu_custom_call.1} parent=1 // pred_region
      %299 = dma.done [#allocation10], 128
    $region53: #{tpu_custom_call.1} parent=1 // pred_fallthru
      _
    // Predicated region
    $region54: #{tpu_custom_call.1} parent=1 // pred_check
      _
    $region55: #{tpu_custom_call.1} parent=1 // pred_check_branch
      %301 = sbr.rel (0) target = $region57
    $region56: #{tpu_custom_call.1} parent=1 // pred_region
      %302 = dma.done [#allocation10], 128
    $region57: #{tpu_custom_call.1} parent=1 // pred_fallthru
      _
    %303 = vsyncpa [#allocation3], 1
    %304 = vsyncpa [#allocation6], 1
    %305 = vsyncpa [#allocation4], 1
    %306 = vsyncpa [#allocation10], 1

</llo_original>
